<compile_context>
chip_gen: v5e
topology: v5e:2x2
jax: 0.10.0
libtpu: 0.0.40
codegen_flags: <defaults>
</compile_context>

<pallas_src>
import functools

import jax
import jax.numpy as jnp
from jax import lax
from jax.experimental import pallas as pl
from jax.experimental.pallas import tpu as pltpu

C1 = 0.01 ** 2
C2 = 0.03 ** 2

_LANE = 128
_SUB = 8
_MAX_BLOCK_BYTES = 6 << 20      # per input, per pipeline buffer
_MAX_BLOCK_ROWS = 1024          # bounds the per-row stats scratch size
_VMEM_LIMIT = 48 << 20          # fits v7x's 64 MiB physical VMEM with headroom


def _round_up(a, b):
    return (a + b - 1) // b * b


# ----------------------------------------------------------------------------
# SSIM (global per-channel SSIM, matching the simplified PyTorch SSIMLoss)
# ----------------------------------------------------------------------------
def _ssim_kernel(x_ref, y_ref, out_ref,
                 sx_ref, sy_ref, sxx_ref, syy_ref, sxy_ref,
                 *, n_cols, total_rows, block_rows):
    # All program_id / num_programs queries and anything derived from them are
    # evaluated here (outside the pl.when bodies) so they never end up inside a
    # lax.cond branch jaxpr.
    i = pl.program_id(0)
    j = pl.program_id(1)
    n_j = pl.num_programs(1)
    row_ids = i * block_rows + lax.broadcasted_iota(
        jnp.int32, (block_rows, 1), 0)
    row_mask = (row_ids < total_rows).astype(jnp.float32)   # (block_rows, 1)

    @pl.when(j == 0)
    def _():
        sx_ref[...] = jnp.zeros_like(sx_ref)
        sy_ref[...] = jnp.zeros_like(sy_ref)
        sxx_ref[...] = jnp.zeros_like(sxx_ref)
        syy_ref[...] = jnp.zeros_like(syy_ref)
        sxy_ref[...] = jnp.zeros_like(sxy_ref)

    x = x_ref[...].astype(jnp.float32)   # (block_rows, block_cols)
    y = y_ref[...].astype(jnp.float32)

    sx_ref[...] += jnp.sum(x, axis=1, keepdims=True)
    sy_ref[...] += jnp.sum(y, axis=1, keepdims=True)
    sxx_ref[...] += jnp.sum(x * x, axis=1, keepdims=True)
    syy_ref[...] += jnp.sum(y * y, axis=1, keepdims=True)
    sxy_ref[...] += jnp.sum(x * y, axis=1, keepdims=True)

    @pl.when(j == n_j - 1)
    def _():
        inv_n = jnp.float32(1.0 / n_cols)
        mu_x = sx_ref[...] * inv_n
        mu_y = sy_ref[...] * inv_n
        var_x = sxx_ref[...] * inv_n - mu_x * mu_x   # population variance
        var_y = syy_ref[...] * inv_n - mu_y * mu_y
        cov = sxy_ref[...] * inv_n - mu_x * mu_y

        num = (2.0 * mu_x * mu_y + C1) * (2.0 * cov + C2)
        den = (mu_x * mu_x + mu_y * mu_y + C1) * (var_x + var_y + C2)
        ssim = (num / den) * row_mask                  # mask padded rows
        partial = jnp.sum(ssim)
        # lane-dense unmasked store of the per-row-tile partial sum
        out_ref[...] = jnp.full(out_ref.shape, partial, dtype=jnp.float32)


def _choose_ssim_blocks(rows, cols, itemsize):
    max_elems = _MAX_BLOCK_BYTES // itemsize
    cols_p = _round_up(cols, _LANE)
    if _SUB * cols_p <= max_elems:
        # full spatial extent fits in one block: grow the row tile
        block_cols = cols_p
        by_vmem = max(_SUB, (max_elems // block_cols) // _SUB * _SUB)
        block_rows = max(_SUB, min(_round_up(rows, _SUB), _MAX_BLOCK_ROWS, by_vmem))
    else:
        # large images: stream over columns, minimal row tile
        block_rows = _SUB
        max_cols = max(_LANE, (max_elems // _SUB) // _LANE * _LANE)
        n_col_tiles = pl.cdiv(cols_p, max_cols)
        block_cols = _round_up(pl.cdiv(cols_p, n_col_tiles), _LANE)
    rows_p = _round_up(rows, block_rows)
    cols_p = _round_up(cols_p, block_cols)
    return block_rows, block_cols, rows_p, cols_p


def ssim_loss(outputs, targets, window_size=11, reduction='mean'):
    """Pallas implementation of SSIMLoss.forward (reduction='mean')."""
    # TODO(synk): window_size is unused — the reference computes a global
    # per-channel SSIM, not a windowed SSIM (kept for signature parity).
    assert outputs.shape == targets.shape
    assert reduction == 'mean', "only 'mean' reduction implemented"
    N, C, H, W = outputs.shape
    rows, cols = N * C, H * W

    block_rows, block_cols, rows_p, cols_p = _choose_ssim_blocks(
        rows, cols, outputs.dtype.itemsize)

    x2 = outputs.reshape(rows, cols)
    y2 = targets.reshape(rows, cols)
    if (rows_p, cols_p) != (rows, cols):
        pad = ((0, rows_p - rows), (0, cols_p - cols))
        x2 = jnp.pad(x2, pad)    # zero padding leaves the streaming sums exact
        y2 = jnp.pad(y2, pad)

    n_row_tiles = rows_p // block_rows
    n_col_tiles = cols_p // block_cols

    kernel = functools.partial(_ssim_kernel, n_cols=cols,
                               total_rows=rows, block_rows=block_rows)

    out = pl.pallas_call(
        kernel,
        out_shape=jax.ShapeDtypeStruct((n_row_tiles, _SUB, _LANE), jnp.float32),
        grid_spec=pltpu.PrefetchScalarGridSpec(
            num_scalar_prefetch=0,
            grid=(n_row_tiles, n_col_tiles),
            in_specs=[
                pl.BlockSpec((block_rows, block_cols), lambda i, j: (i, j)),
                pl.BlockSpec((block_rows, block_cols), lambda i, j: (i, j)),
            ],
            out_specs=pl.BlockSpec((1, _SUB, _LANE), lambda i, j: (i, 0, 0)),
            scratch_shapes=[pltpu.VMEM((block_rows, 1), jnp.float32)] * 5,
        ),
        compiler_params=pltpu.CompilerParams(
            dimension_semantics=("parallel", "arbitrary"),
            vmem_limit_bytes=_VMEM_LIMIT),
    )(x2, y2)

    return 1.0 - jnp.sum(out[:, 0, 0]) / jnp.float32(rows)


# ----------------------------------------------------------------------------
# Elementwise mean losses (mse / mae / huber(SmoothL1) / charbonnier)
# ----------------------------------------------------------------------------
def _elem_loss_kernel(x_ref, y_ref, out_ref, *, kind, epsilon):
    x = x_ref[...].astype(jnp.float32)
    y = y_ref[...].astype(jnp.float32)
    d = x - y
    if kind == 'mse':
        v = d * d
    elif kind == 'mae':
        v = jnp.abs(d)
    elif kind == 'charbonnier':
        eps = jnp.float32(epsilon)
        v = jnp.sqrt(d * d + eps * eps)
    elif kind == 'huber':
        # PyTorch HuberLoss wraps nn.SmoothL1Loss() (beta=1.0); `delta` is ignored.
        ad = jnp.abs(d)
        v = jnp.where(ad < 1.0, 0.5 * d * d, ad - 0.5)
    else:
        raise ValueError(kind)
    out_ref[...] = jnp.full(out_ref.shape, jnp.sum(v), dtype=jnp.float32)


def elementwise_mean_loss(outputs, targets, kind, epsilon=1e-6):
    assert outputs.shape == targets.shape
    n = int(outputs.size)
    itemsize = outputs.dtype.itemsize
    max_elems = _MAX_BLOCK_BYTES // itemsize

    width = _LANE * 4 if n >= _SUB * _LANE * 4 else _LANE
    rows = pl.cdiv(n, width)
    by_vmem = max(_SUB, (max_elems // width) // _SUB * _SUB)
    block_rows = max(_SUB, min(_MAX_BLOCK_ROWS, by_vmem, _round_up(rows, _SUB)))
    rows_p = _round_up(rows, block_rows)
    total_p = rows_p * width
    n_pad = total_p - n

    x = outputs.reshape(-1)
    y = targets.reshape(-1)
    if n_pad:
        x = jnp.pad(x, (0, n_pad))
        y = jnp.pad(y, (0, n_pad))
    x2 = x.reshape(rows_p, width)
    y2 = y.reshape(rows_p, width)

    n_tiles = rows_p // block_rows
    kernel = functools.partial(_elem_loss_kernel, kind=kind, epsilon=epsilon)
    out = pl.pallas_call(
        kernel,
        out_shape=jax.ShapeDtypeStruct((n_tiles, _SUB, _LANE), jnp.float32),
        grid_spec=pltpu.PrefetchScalarGridSpec(
            num_scalar_prefetch=0,
            grid=(n_tiles,),
            in_specs=[
                pl.BlockSpec((block_rows, width), lambda i: (i, 0)),
                pl.BlockSpec((block_rows, width), lambda i: (i, 0)),
            ],
            out_specs=pl.BlockSpec((1, _SUB, _LANE), lambda i: (i, 0, 0)),
        ),
        compiler_params=pltpu.CompilerParams(
            dimension_semantics=("parallel",),
            vmem_limit_bytes=_VMEM_LIMIT),
    )(x2, y2)

    total = jnp.sum(out[:, 0, 0])
    if n_pad:
        # Padded (0, 0) pairs contribute f(0) each; exactly replicate the kernel math.
        if kind == 'charbonnier':
            eps = jnp.float32(epsilon)
            pad_val = jnp.sqrt(eps * eps)
        else:
            pad_val = jnp.float32(0.0)
        total = total - jnp.float32(n_pad) * pad_val
    return total / jnp.float32(n)


# ----------------------------------------------------------------------------
# LossSelector
# ----------------------------------------------------------------------------
class LossSelector:
    """JAX/Pallas port of the PyTorch LossSelector forward pass."""

    _SUPPORTED = ('mse', 'mae', 'huber', 'charbonnier', 'ssim')

    def __init__(self, loss_config=None, **kwargs):
        if loss_config is None:
            loss_config = {'mse': 1.0}
        self._terms = []
        for loss_type, weight in loss_config.items():
            kind = loss_type.lower()
            if kind not in self._SUPPORTED:
                # TODO(synk): 'perceptual' (VGGPerceptualLoss) needs pretrained
                # VGG16 weights + bilinear resize; no self-contained Pallas port.
                raise ValueError(f'Unsupported loss type: {loss_type}')
            self._terms.append((kind, float(weight)))
        self._kwargs = kwargs

    def __call__(self, outputs, targets):
        total = jnp.float32(0.0)
        for kind, weight in self._terms:
            if kind == 'ssim':
                term = ssim_loss(outputs, targets,
                                 window_size=self._kwargs.get('window_size', 11),
                                 reduction=self._kwargs.get('reduction', 'mean'))
            else:
                term = elementwise_mean_loss(
                    outputs, targets, kind,
                    epsilon=self._kwargs.get('epsilon', 1e-6))
            total = total + weight * term
        return total


# ----------------------------------------------------------------------------
# Pure-JAX references
# ----------------------------------------------------------------------------
def _ref_elem_loss(outputs, targets, kind, epsilon=1e-6):
    d = outputs.astype(jnp.float32) - targets.astype(jnp.float32)
    if kind == 'mse':
        return jnp.mean(d * d)
    if kind == 'mae':
        return jnp.mean(jnp.abs(d))
    if kind == 'charbonnier':
        return jnp.mean(jnp.sqrt(d * d + epsilon ** 2))
    if kind == 'huber':
        ad = jnp.abs(d)
        return jnp.mean(jnp.where(ad < 1.0, 0.5 * d * d, ad - 0.5))
    raise ValueError(kind)


def _ref_ssim_loss(outputs, targets):
    mu_x = jnp.mean(outputs, axis=(2, 3), keepdims=True)
    mu_y = jnp.mean(targets, axis=(2, 3), keepdims=True)
    var_x = jnp.var(outputs, axis=(2, 3), keepdims=True)
    var_y = jnp.var(targets, axis=(2, 3), keepdims=True)
    cov = jnp.mean((outputs - mu_x) * (targets - mu_y), axis=(2, 3), keepdims=True)
    ssim = (2 * mu_x * mu_y + C1) * (2 * cov + C2) / \
           ((mu_x ** 2 + mu_y ** 2 + C1) * (var_x + var_y + C2))
    return 1.0 - jnp.mean(ssim)


if __name__ == "__main__":
    key = jax.random.PRNGKey(0)
    k1, k2, k3, k4 = jax.random.split(key, 4)

    N, C, H, W = 2, 4, 16, 16
    outputs = jax.random.uniform(k1, (N, C, H, W), dtype=jnp.float32)
    targets = jax.random.uniform(k2, (N, C, H, W), dtype=jnp.float32)

    # 1) Default config -> {'mse': 1.0}, matching the PyTorch default.
    sel_default = LossSelector()
    loss_default = jax.block_until_ready(sel_default(outputs, targets))
    ref_default = _ref_elem_loss(outputs, targets, 'mse')
    assert jnp.allclose(loss_default, ref_default, atol=1e-5, rtol=1e-5), \
        (loss_default, ref_default)

    # 2) Weighted multi-loss config.
    cfg = {'mse': 1.0, 'ssim': 0.5, 'charbonnier': 0.25, 'mae': 0.1, 'huber': 0.05}
    sel = LossSelector(cfg)
    loss = jax.block_until_ready(sel(outputs, targets))
    ref = (1.0 * _ref_elem_loss(outputs, targets, 'mse')
           + 0.5 * _ref_ssim_loss(outputs, targets)
           + 0.25 * _ref_elem_loss(outputs, targets, 'charbonnier')
           + 0.1 * _ref_elem_loss(outputs, targets, 'mae')
           + 0.05 * _ref_elem_loss(outputs, targets, 'huber'))
    assert jnp.allclose(loss, ref, atol=1e-5, rtol=1e-5), (loss, ref)

    # 3) SSIM path exercising row padding (N*C=6 -> 8) and column zero-padding.
    o3 = jax.random.uniform(k3, (2, 3, 20, 20), dtype=jnp.float32)
    t3 = jax.random.uniform(k4, (2, 3, 20, 20), dtype=jnp.float32)
    l3 = jax.block_until_ready(ssim_loss(o3, t3))
    r3 = _ref_ssim_loss(o3, t3)
    assert jnp.allclose(l3, r3, atol=1e-5, rtol=1e-5), (l3, r3)

    # 4) SSIM path exercising the streaming column axis (H*W too big for one block).
    o4 = jax.random.uniform(k3, (1, 2, 448, 512), dtype=jnp.float32)
    t4 = jax.random.uniform(k4, (1, 2, 448, 512), dtype=jnp.float32)
    l4 = jax.block_until_ready(ssim_loss(o4, t4))
    r4 = _ref_ssim_loss(o4, t4)
    assert jnp.allclose(l4, r4, atol=1e-4, rtol=1e-4), (l4, r4)

    print("KERNEL_OK")
</pallas_src>

<mosaic_0001>
module attributes {stable_mosaic.version = 11 : i64} {
  func.func @_elem_loss_kernel(%arg0: i32, %arg1: memref<16x128xf32, #tpu.memory_space<vmem>>, %arg2: memref<16x128xf32, #tpu.memory_space<vmem>>, %arg3: memref<1x8x128xf32, #tpu.memory_space<vmem>>) attributes {dimension_semantics = [#tpu.dimension_semantics<parallel>], iteration_bounds = array<i64: 1>, scalar_prefetch = 0 : i64, scratch_operands = 0 : i64, tpu.core_type = #tpu.core_type<tc>, window_params = [{transform_indices = @transform_0, window_bounds = array<i64: 16, 128>}, {transform_indices = @transform_1, window_bounds = array<i64: 16, 128>}, {transform_indices = @transform_2, window_bounds = array<i64: 1, 8, 128>}]} {
    %c0 = arith.constant 0 : index
    %c0_0 = arith.constant 0 : index
    %0 = vector.load %arg1[%c0, %c0_0] : memref<16x128xf32, #tpu.memory_space<vmem>>, vector<16x128xf32>
    %c0_1 = arith.constant 0 : index
    %c0_2 = arith.constant 0 : index
    %1 = vector.load %arg2[%c0_1, %c0_2] : memref<16x128xf32, #tpu.memory_space<vmem>>, vector<16x128xf32>
    %2 = arith.subf %0, %1 : vector<16x128xf32>
    %3 = arith.mulf %2, %2 : vector<16x128xf32>
    %4 = vector.shape_cast %3 : vector<16x128xf32> to vector<1x16x128xf32>
    %cst = arith.constant dense<0.000000e+00> : vector<1xf32>
    %5 = vector.multi_reduction <add>, %4, %cst [1, 2] : vector<1x16x128xf32> to vector<1xf32>
    %6 = vector.shape_cast %5 : vector<1xf32> to vector<1x1x1xf32>
    %7 = vector.extract %6[0, 0, 0] : f32 from vector<1x1x1xf32>
    %8 = vector.broadcast %7 : f32 to vector<1x8x128xf32>
    %c0_3 = arith.constant 0 : index
    %c0_4 = arith.constant 0 : index
    %c0_5 = arith.constant 0 : index
    %9 = vector.load %arg3[%c0_3, %c0_4, %c0_5] : memref<1x8x128xf32, #tpu.memory_space<vmem>>, vector<1x8x128xf32>
    tpu.vector_store %arg3[%c0_3, %c0_4, %c0_5], %8 {strides = array<i32>} : memref<1x8x128xf32, #tpu.memory_space<vmem>>, vector<1x8x128xf32>,
    return
  }
  func.func @transform_0(%arg0: i32) -> (i32, i32) {
    %c0_i32 = arith.constant 0 : i32
    %c0_i32_0 = arith.constant 0 : i32
    return %arg0, %c0_i32 : i32, i32
  }
  func.func @transform_1(%arg0: i32) -> (i32, i32) {
    %c0_i32 = arith.constant 0 : i32
    %c0_i32_0 = arith.constant 0 : i32
    return %arg0, %c0_i32 : i32, i32
  }
  func.func @transform_2(%arg0: i32) -> (i32, i32, i32) {
    %c0_i32 = arith.constant 0 : i32
    %c0_i32_0 = arith.constant 0 : i32
    %c0_i32_1 = arith.constant 0 : i32
    return %arg0, %c0_i32, %c0_i32_0 : i32, i32, i32
  }
}

</mosaic_0001>

<llo_original>
// kernel: tpu_custom_call.1
$region0: #{tpu_custom_call.1}
  #allocation0 [shape = 'u32[]', space=smem, size = 0x4, offset = 0x4, fixed_abs, tag = 'smem constant byte address 0x4 - core index']
  #allocation1 [shape = 'u32[72,128]{1,0:T(1,128)}', space=vmem, size = 0x9000, scoped, tag = 'internal scratch']
  %s0 = inlined_call_operand.hbm [shape: f32[16,128], index: 0, kind: input, shape index: {}]
  %s1 = inlined_call_operand.hbm [shape: f32[16,128], index: 1, kind: input, shape index: {}]
  %s2 = inlined_call_operand.hbm [shape: f32[1,8,128], index: 2, kind: output, shape index: {}]
  %s3 = sld [smem:[#allocation0]]
  $region26: #{tpu_custom_call.1} parent=0
    _
  %s5 = ssub.s32 1, %s3
  %s6 = scalar_select 0, %s5, %s3
  $region1: #{tpu_custom_call.1} parent=0
    #allocation2 [shape = 'u8[8192]{0}', space=vmem, size = 0x2000, scoped, tag = 'input window, operand 0, single buffered']
    #allocation3 [shape = 's32[1]{0}', space=sflag, size = 0x4, scoped, tag = 'scoped memory for tpu_custom_call.1']
    #allocation4 [shape = 's32[1]{0}', space=sflag, size = 0x4, scoped, tag = 'scoped memory for tpu_custom_call.1']
    #allocation5 [shape = 'u8[8192]{0}', space=vmem, size = 0x2000, scoped, tag = 'input window, operand 1, single buffered']
    #allocation6 [shape = 's32[1]{0}', space=sflag, size = 0x4, scoped, tag = 'scoped memory for tpu_custom_call.1']
    #allocation7 [shape = 'u8[4096]{0}', space=vmem, size = 0x1000, scoped, tag = 'output window, operand 0, single buffered']
    %7 = vsyncpa [#allocation3], 0
    %8 = vsyncpa [#allocation6], 0
    %9 = vsyncpa [#allocation4], 0
    // Predicated region
    $region2: #{tpu_custom_call.1} parent=1 // pred_check
      _
    $region3: #{tpu_custom_call.1} parent=1 // pred_check_branch
      %11 = sbr.rel (0) target = $region5
    $region4: #{tpu_custom_call.1} parent=1 // pred_region
      %13 = vsyncadd [#allocation3], 0
      %s14 = sshll.u32 %s0, 4
      %s15 = int_to_ptr.hbm [resolvable:$true] %s14
      %s16 = sshll.u32 [#allocation2], 4
      %s17 = int_to_ptr.vmem [resolvable:$true] %s16
      %22 = dma.hbm_to_vmem [thread:$0]  %s15, 256, %s17, [#allocation3], 128, 128, 8
    $region5: #{tpu_custom_call.1} parent=1 // pred_fallthru
      _
    // Predicated region
    $region6: #{tpu_custom_call.1} parent=1 // pred_check
      _
    $region7: #{tpu_custom_call.1} parent=1 // pred_check_branch
      %24 = sbr.rel (0) target = $region9
    $region8: #{tpu_custom_call.1} parent=1 // pred_region
      %26 = vsyncadd [#allocation6], 0
      %s27 = sshll.u32 %s1, 4
      %s28 = int_to_ptr.hbm [resolvable:$true] %s27
      %s29 = sshll.u32 [#allocation5], 4
      %s30 = int_to_ptr.vmem [resolvable:$true] %s29
      %35 = dma.hbm_to_vmem [thread:$0]  %s28, 256, %s30, [#allocation6], 128, 128, 8
    $region9: #{tpu_custom_call.1} parent=1 // pred_fallthru
      _
    // Predicated region
    $region10: #{tpu_custom_call.1} parent=1 // pred_check
      _
    $region11: #{tpu_custom_call.1} parent=1 // pred_check_branch
      %37 = sbr.rel (0) target = $region13
    $region12: #{tpu_custom_call.1} parent=1 // pred_region
      %39 = dma.done [#allocation3], 256
    $region13: #{tpu_custom_call.1} parent=1 // pred_fallthru
      _
    // Predicated region
    $region14: #{tpu_custom_call.1} parent=1 // pred_check
      _
    $region15: #{tpu_custom_call.1} parent=1 // pred_check_branch
      %41 = sbr.rel (0) target = $region17
    $region16: #{tpu_custom_call.1} parent=1 // pred_region
      %43 = dma.done [#allocation6], 256
    $region17: #{tpu_custom_call.1} parent=1 // pred_fallthru
      _
    %v44 = vld [vmem:[#allocation2] sm:$0xff]
    %v45 = vld [vmem:[#allocation2 + $0x8] sm:$0xff]
    %v46 = vld [vmem:[#allocation5] sm:$0xff]
    %v47 = vld [vmem:[#allocation5 + $0x8] sm:$0xff]
    %v48 = vsub.f32 %v44, %v46
    %v49 = vsub.f32 %v45, %v47
    %v50 = vmul.f32 %v48, %v48
    %v51 = vmul.f32 %v49, %v49
    %v52 = vadd.f32 %v50, %v51
    %53 = vadd.xlane.f32.xlu0 %v52
    %v54 = vpop.xlane.xlu0 %53
    %v55 = vrot.slane %v54, 4
    %v56 = vadd.f32 %v54, %v55
    %v57 = vrot.slane %v56, 2
    %v58 = vadd.f32 %v56, %v57
    %v59 = vrot.slane %v58, 1
    %v60 = vadd.f32 %v58, %v59
    %s61 = vtos %v60
    %v62 = vstv %s61
    %63 = vst [vmem:[#allocation7] sm:$0xff] %v62
    // Predicated region
    $region18: #{tpu_custom_call.1} parent=1 // pred_check
      _
    $region19: #{tpu_custom_call.1} parent=1 // pred_check_branch
      %65 = sbr.rel (0) target = $region21
    $region20: #{tpu_custom_call.1} parent=1 // pred_region
      %67 = vsyncadd [#allocation4], 0
      %s69 = sshll.u32 [#allocation7], 4
      %s70 = int_to_ptr.vmem [resolvable:$true] %s69
      %s71 = sshll.u32 %s2, 4
      %s72 = int_to_ptr.hbm [resolvable:$true] %s71
      %74 = dma.vmem_to_hbm [thread:$0]  %s70, 128, %s72, [#allocation4]
    $region21: #{tpu_custom_call.1} parent=1 // pred_fallthru
      _
    // Predicated region
    $region22: #{tpu_custom_call.1} parent=1 // pred_check
      _
    $region23: #{tpu_custom_call.1} parent=1 // pred_check_branch
      %76 = sbr.rel (0) target = $region25
    $region24: #{tpu_custom_call.1} parent=1 // pred_region
      %78 = dma.done [#allocation4], 128
    $region25: #{tpu_custom_call.1} parent=1 // pred_fallthru
      _
    %79 = vsyncpa [#allocation3], 1
    %80 = vsyncpa [#allocation6], 1
    %81 = vsyncpa [#allocation4], 1

</llo_original>
